<compile_context>
chip_gen: v7x
topology: tpu7x:2x2x1
jax: 0.10.0
libtpu: 0.0.40
codegen_flags: <defaults>
</compile_context>

<pallas_src>
import jax
import jax.numpy as jnp
from jax import lax
from jax.experimental import pallas as pl
from jax.experimental.pallas import tpu as pltpu

EPS = 1e-5          # InstanceNorm2d default eps
NEG_SLOPE = 0.2     # LeakyReLU slope

# ConvTranspose2d(k=4, stride=2, pad=1): output row 2i+r receives padded-input
# row i+dh through kernel tap kh for (dh, kh) in _TAPS[r]  (same along columns).
_TAPS = {0: ((0, 3), (1, 1)), 1: ((1, 2), (2, 0))}


# --------------------------------------------------------------------------
# Kernel 1: transposed-conv matmul (bf16 MXU) + streamed per-row stats.
# --------------------------------------------------------------------------
def _conv_stats_kernel(patch_ref, w_ref, y_ref, sum_ref, ssq_ref):
    h = pl.program_id(1)

    # One fused MXU matmul per (sample, HW tile); lane-dense result.
    y = jnp.dot(w_ref[...], patch_ref[0],
                preferred_element_type=jnp.float32)        # (4*C_out, HW_T) f32
    y_ref[0] = y

    # Reduce along lanes BEFORE any grouping (XLU slot, free under the MXU);
    # parity grouping happens on tiny (N, 4*C_out) tensors in the wrapper.
    rs = jnp.sum(y, axis=1, keepdims=True)                 # (4*C_out, 1)
    rq = jnp.sum(y * y, axis=1, keepdims=True)             # (4*C_out, 1)

    @pl.when(h == 0)
    def _():
        sum_ref[0] = rs
        ssq_ref[0] = rq

    @pl.when(h > 0)
    def _():
        sum_ref[0] = sum_ref[0] + rs
        ssq_ref[0] = ssq_ref[0] + rq


# --------------------------------------------------------------------------
# Kernel 2: finalize — affine normalize + LeakyReLU over HW tiles.
# --------------------------------------------------------------------------
def _norm_act_kernel(y_ref, s_ref, b_ref, o_ref):
    z = y_ref[0] * s_ref[0] + b_ref[0]                     # one VPU FMA pass
    o_ref[0] = jnp.maximum(z, NEG_SLOPE * z)               # LeakyReLU(0.2)


def _fused_weight(w, C_in, C_out):
    """(C_in, C_out, 4, 4) torch ConvTranspose2d weight -> (4*C_out, 9*C_in).

    Row index = c_out*4 + (r*2 + s); column index = (dh*3 + dw)*C_in + c_in.
    Entries are zero where a (dh, dw) tap does not feed parity (r, s).
    (4/9-dense; per-parity split would recover the zero FLOPs when MXU-bound.)
    """
    w = w.astype(jnp.float32)
    wf = jnp.zeros((C_out, 2, 2, 3, 3, C_in), jnp.float32)
    for r in (0, 1):
        for (dh, kh) in _TAPS[r]:
            for s in (0, 1):
                for (dw, kw) in _TAPS[s]:
                    wf = wf.at[:, r, s, dh, dw, :].set(jnp.transpose(w[:, :, kh, kw]))
    return wf.reshape(4 * C_out, 9 * C_in)


def _pick_hw_tile(HW, C_in, C_out, vmem_budget_bytes=40 << 20):
    """Largest multiple-of-128 tile dividing HW under a per-generation VMEM budget."""
    if HW % 128 != 0:
        return HW  # lane-masked single tile; correct, just not lane-dense
    # double-buffered bf16 patch + f32 conv-out per lane column (call 1 dominates)
    per_lane = 2 * (9 * C_in * 2 + 4 * C_out * 4)
    cap = max(128, (vmem_budget_bytes // per_lane) // 128 * 128)
    t = min(cap, HW)
    t = (t // 128) * 128
    while t >= 128 and HW % t != 0:
        t -= 128
    return t if t >= 128 else HW


def upconv_forward(x_nchw, w, b, gamma, beta, *, hw_tile=None):
    """x_nchw: (N, C_in, H, W); w: (C_in, C_out, 4, 4) torch ConvTranspose2d layout."""
    del b  # ConvT bias is exactly cancelled by InstanceNorm's mean subtraction.
    N, C_in, H, W = x_nchw.shape
    C_out = w.shape[1]
    HW = H * W

    if hw_tile is None:
        hw_tile = _pick_hw_tile(HW, C_in, C_out)
    if HW % hw_tile != 0 or (hw_tile != HW and hw_tile % 128 != 0):
        hw_tile = HW
    n_hw = HW // hw_tile

    # --- wrapper-side im2col of the 3x3 tap window (bf16, shared by all parities).
    xb = x_nchw.astype(jnp.bfloat16)
    xp = jnp.pad(xb, ((0, 0), (0, 0), (1, 1), (1, 1)))               # (N, C_in, H+2, W+2)
    taps = [xp[:, :, dh:dh + H, dw:dw + W] for dh in range(3) for dw in range(3)]
    patch = jnp.stack(taps, axis=1).reshape(N, 9 * C_in, HW)         # (N, 9*C_in, HW) bf16

    wf = _fused_weight(w, C_in, C_out).astype(jnp.bfloat16)          # (4*C_out, 9*C_in)

    # VMEM budget (double-buffered streaming blocks + resident weight), clamped
    # to stay inside every generation's physical VMEM (v7x: 64 MiB).
    call1_vmem = (2 * (9 * C_in * hw_tile * 2 + 4 * C_out * hw_tile * 4)
                  + 4 * C_out * 9 * C_in * 2 + 8 * 4 * C_out * 4)
    vmem_limit = int(min(max(2 * call1_vmem, 32 << 20), 64 << 20))

    # ---------------- call 1: conv + streamed stats ----------------
    flops1 = 2 * N * (4 * C_out) * (9 * C_in) * HW
    bytes1 = (patch.size * 2 + wf.size * 2
              + N * 4 * C_out * HW * 4 + 2 * N * 4 * C_out * 4)
    y_pb, row_sum, row_ssq = pl.pallas_call(
        _conv_stats_kernel,
        out_shape=(
            jax.ShapeDtypeStruct((N, 4 * C_out, HW), jnp.float32),   # conv out (parity-blocked)
            jax.ShapeDtypeStruct((N, 4 * C_out, 1), jnp.float32),    # per-row sum
            jax.ShapeDtypeStruct((N, 4 * C_out, 1), jnp.float32),    # per-row sum of squares
        ),
        grid_spec=pltpu.PrefetchScalarGridSpec(
            num_scalar_prefetch=0,
            grid=(N, n_hw),
            in_specs=[
                pl.BlockSpec((1, 9 * C_in, hw_tile), lambda n, h: (n, 0, h)),
                pl.BlockSpec((4 * C_out, 9 * C_in), lambda n, h: (0, 0)),
            ],
            out_specs=(
                pl.BlockSpec((1, 4 * C_out, hw_tile), lambda n, h: (n, 0, h)),
                pl.BlockSpec((1, 4 * C_out, 1), lambda n, h: (n, 0, 0)),   # accumulator
                pl.BlockSpec((1, 4 * C_out, 1), lambda n, h: (n, 0, 0)),   # accumulator
            ),
        ),
        compiler_params=pltpu.CompilerParams(
            dimension_semantics=("parallel", "arbitrary"),
            vmem_limit_bytes=vmem_limit),
        cost_estimate=pl.CostEstimate(
            flops=int(flops1), transcendentals=0, bytes_accessed=int(bytes1)),
    )(patch, wf)

    # ---------------- tiny wrapper math: group parities, fold scale/bias -------
    # sum(A@Y) == A@sum(Y): grouping now touches only (N, 4*C_out) scalars.
    cnt = 4.0 * HW
    s = row_sum.reshape(N, C_out, 4).sum(-1)                 # (N, C_out)
    q = row_ssq.reshape(N, C_out, 4).sum(-1)
    mean = s / cnt
    var = q / cnt - mean * mean                              # f32 accumulators; fine here
    scale_c = gamma.astype(jnp.float32)[None, :] * lax.rsqrt(var + EPS)
    bias_c = beta.astype(jnp.float32)[None, :] - mean * scale_c
    scale_rows = jnp.repeat(scale_c, 4, axis=1).reshape(N, 4 * C_out, 1)
    bias_rows = jnp.repeat(bias_c, 4, axis=1).reshape(N, 4 * C_out, 1)

    # ---------------- call 2: normalize + LeakyReLU ----------------
    flops2 = 3 * N * 4 * C_out * HW
    bytes2 = 2 * N * 4 * C_out * HW * 4 + 2 * N * 4 * C_out * 4
    out_pb = pl.pallas_call(
        _norm_act_kernel,
        out_shape=jax.ShapeDtypeStruct((N, 4 * C_out, HW), jnp.float32),
        grid_spec=pltpu.PrefetchScalarGridSpec(
            num_scalar_prefetch=0,
            grid=(N, n_hw),
            in_specs=[
                pl.BlockSpec((1, 4 * C_out, hw_tile), lambda n, h: (n, 0, h)),
                pl.BlockSpec((1, 4 * C_out, 1), lambda n, h: (n, 0, 0)),
                pl.BlockSpec((1, 4 * C_out, 1), lambda n, h: (n, 0, 0)),
            ],
            out_specs=pl.BlockSpec((1, 4 * C_out, hw_tile), lambda n, h: (n, 0, h)),
        ),
        compiler_params=pltpu.CompilerParams(
            dimension_semantics=("parallel", "parallel"),
            vmem_limit_bytes=vmem_limit),
        cost_estimate=pl.CostEstimate(
            flops=int(flops2), transcendentals=0, bytes_accessed=int(bytes2)),
    )(y_pb, scale_rows, bias_rows)

    # Interleave parities: out[n, c*4 + r*2 + s, i*W + j] -> (n, c, 2i+r, 2j+s).
    y = out_pb.reshape(N, C_out, 2, 2, H, W)                 # (n, c, r, s, i, j)
    y = jnp.transpose(y, (0, 1, 4, 2, 5, 3))                 # (n, c, i, r, j, s)
    return y.reshape(N, C_out, 2 * H, 2 * W)                 # NCHW


def upconv_reference(x, w, b, gamma, beta):
    """Pure-JAX reference matching PyTorch semantics (NCHW, f32)."""
    y = lax.conv_general_dilated(
        x, w[:, :, ::-1, ::-1],
        window_strides=(1, 1), padding=((2, 2), (2, 2)),
        lhs_dilation=(2, 2), rhs_dilation=(1, 1),
        dimension_numbers=("NCHW", "IOHW", "NCHW"))
    y = y + b[None, :, None, None]
    mean = jnp.mean(y, axis=(2, 3), keepdims=True)
    var = jnp.var(y, axis=(2, 3), keepdims=True)
    z = (y - mean) * lax.rsqrt(var + EPS)
    z = z * gamma[None, :, None, None] + beta[None, :, None, None]
    return jnp.where(z >= 0, z, NEG_SLOPE * z)


if __name__ == "__main__":
    N, C_IN, C_OUT, H, W = 2, 4, 8, 16, 16

    key = jax.random.PRNGKey(0)
    kx, kw, kb, kg, kbe = jax.random.split(key, 5)

    x = jax.random.normal(kx, (N, C_IN, H, W), dtype=jnp.float32)
    # ConvTranspose2d params: weight (ch_in, ch_out, 4, 4), bias (ch_out,)
    w = 0.1 * jax.random.normal(kw, (C_IN, C_OUT, 4, 4), dtype=jnp.float32)
    b = 0.1 * jax.random.normal(kb, (C_OUT,), dtype=jnp.float32)
    # InstanceNorm2d affine params
    gamma = 1.0 + 0.1 * jax.random.normal(kg, (C_OUT,), dtype=jnp.float32)
    beta = 0.1 * jax.random.normal(kbe, (C_OUT,), dtype=jnp.float32)

    TOL = 5e-2  # bf16 MXU inputs (f32 accumulation) -> expected max err ~1e-2

    # hw_tile=128 -> 2 HW tiles per sample: exercises the streamed-stats path.
    out = jax.block_until_ready(upconv_forward(x, w, b, gamma, beta, hw_tile=128))
    ref = jax.block_until_ready(upconv_reference(x, w, b, gamma, beta))
    assert out.shape == (N, C_OUT, 2 * H, 2 * W)
    max_err = float(jnp.max(jnp.abs(out - ref)))
    assert max_err < TOL, f"mismatch vs reference: {max_err}"

    # Lock in the bias-cancellation claim: a large ConvT bias must not change
    # the result (it is removed by InstanceNorm's mean subtraction).
    out_b = jax.block_until_ready(upconv_forward(x, w, 100.0 * b, gamma, beta, hw_tile=128))
    ref_b = jax.block_until_ready(upconv_reference(x, w, 100.0 * b, gamma, beta))
    max_err_b = float(jnp.max(jnp.abs(out_b - ref_b)))
    assert max_err_b < TOL, f"mismatch vs reference (large bias): {max_err_b}"

    print("KERNEL_OK")
</pallas_src>

<mosaic_0001>
module attributes {stable_mosaic.version = 11 : i64} {
  func.func @_conv_stats_kernel(%arg0: i32, %arg1: i32, %arg2: memref<1x36x128xbf16, #tpu.memory_space<vmem>>, %arg3: memref<32x36xbf16, #tpu.memory_space<vmem>>, %arg4: memref<1x32x128xf32, #tpu.memory_space<vmem>>, %arg5: memref<1x32x1xf32, #tpu.memory_space<vmem>>, %arg6: memref<1x32x1xf32, #tpu.memory_space<vmem>>) attributes {dimension_semantics = [#tpu.dimension_semantics<parallel>, #tpu.dimension_semantics<arbitrary>], iteration_bounds = array<i64: 2, 2>, scalar_prefetch = 0 : i64, scratch_operands = 0 : i64, tpu.core_type = #tpu.core_type<tc>, window_params = [{transform_indices = @transform_0, window_bounds = array<i64: 1, 36, 128>}, {pipeline_mode = #tpu.pipeline_mode<synchronous>, transform_indices = @transform_1, window_bounds = array<i64: 32, 36>}, {transform_indices = @transform_2, window_bounds = array<i64: 1, 32, 128>}, {transform_indices = @transform_3, window_bounds = array<i64: 1, 32, 1>}, {transform_indices = @transform_4, window_bounds = array<i64: 1, 32, 1>}]} {
    %c0 = arith.constant 0 : index
    %c0_0 = arith.constant 0 : index
    %0 = vector.load %arg3[%c0, %c0_0] : memref<32x36xbf16, #tpu.memory_space<vmem>>, vector<32x36xbf16>
    %c0_1 = arith.constant 0 : index
    %c0_2 = arith.constant 0 : index
    %c0_3 = arith.constant 0 : index
    %1 = vector.load %arg2[%c0_1, %c0_2, %c0_3] : memref<1x36x128xbf16, #tpu.memory_space<vmem>>, vector<1x36x128xbf16>
    %2 = vector.shape_cast %1 : vector<1x36x128xbf16> to vector<36x128xbf16>
    %cst = arith.constant dense<0.000000e+00> : vector<32x128xf32>
    %3 = tpu.matmul %0, %2, %cst {dimension_numbers = #tpu.dot_dimension_numbers<[1], [0], [0], [1], [0, 0, 1, 1], [], []>} : vector<32x36xbf16>, vector<36x128xbf16>, vector<32x128xf32> -> vector<32x128xf32>
    %c0_4 = arith.constant 0 : index
    %c0_5 = arith.constant 0 : index
    %c0_6 = arith.constant 0 : index
    %4 = vector.load %arg4[%c0_4, %c0_5, %c0_6] : memref<1x32x128xf32, #tpu.memory_space<vmem>>, vector<1x32x128xf32>
    %5 = vector.shape_cast %4 : vector<1x32x128xf32> to vector<32x128xf32>
    %6 = vector.shape_cast %3 : vector<32x128xf32> to vector<1x32x128xf32>
    tpu.vector_store %arg4[%c0_4, %c0_5, %c0_6], %6 {strides = array<i32>} : memref<1x32x128xf32, #tpu.memory_space<vmem>>, vector<1x32x128xf32>,
    %cst_7 = arith.constant dense<0.000000e+00> : vector<32xf32>
    %7 = vector.multi_reduction <add>, %3, %cst_7 [1] : vector<32x128xf32> to vector<32xf32>
    %8 = vector.shape_cast %7 : vector<32xf32> to vector<32x1xf32>
    %9 = arith.mulf %3, %3 : vector<32x128xf32>
    %cst_8 = arith.constant dense<0.000000e+00> : vector<32xf32>
    %10 = vector.multi_reduction <add>, %9, %cst_8 [1] : vector<32x128xf32> to vector<32xf32>
    %11 = vector.shape_cast %10 : vector<32xf32> to vector<32x1xf32>
    %c0_i32 = arith.constant 0 : i32
    %12 = arith.cmpi eq, %arg1, %c0_i32 : i32
    %13 = arith.extui %12 : i1 to i32
    %c0_i32_9 = arith.constant 0 : i32
    %14 = arith.cmpi ne, %13, %c0_i32_9 : i32
    scf.if %14 {
      %c0_12 = arith.constant 0 : index
      %c0_13 = arith.constant 0 : index
      %c0_14 = arith.constant 0 : index
      %18 = vector.load %arg5[%c0_12, %c0_13, %c0_14] : memref<1x32x1xf32, #tpu.memory_space<vmem>>, vector<1x32x1xf32>
      %19 = vector.shape_cast %18 : vector<1x32x1xf32> to vector<32x1xf32>
      %20 = vector.shape_cast %8 : vector<32x1xf32> to vector<1x32x1xf32>
      tpu.vector_store %arg5[%c0_12, %c0_13, %c0_14], %20 {strides = array<i32>} : memref<1x32x1xf32, #tpu.memory_space<vmem>>, vector<1x32x1xf32>,
      %c0_15 = arith.constant 0 : index
      %c0_16 = arith.constant 0 : index
      %c0_17 = arith.constant 0 : index
      %21 = vector.load %arg6[%c0_15, %c0_16, %c0_17] : memref<1x32x1xf32, #tpu.memory_space<vmem>>, vector<1x32x1xf32>
      %22 = vector.shape_cast %21 : vector<1x32x1xf32> to vector<32x1xf32>
      %23 = vector.shape_cast %11 : vector<32x1xf32> to vector<1x32x1xf32>
      tpu.vector_store %arg6[%c0_15, %c0_16, %c0_17], %23 {strides = array<i32>} : memref<1x32x1xf32, #tpu.memory_space<vmem>>, vector<1x32x1xf32>,
    } else {
    }
    %c0_i32_10 = arith.constant 0 : i32
    %15 = arith.cmpi sgt, %arg1, %c0_i32_10 : i32
    %16 = arith.extui %15 : i1 to i32
    %c0_i32_11 = arith.constant 0 : i32
    %17 = arith.cmpi ne, %16, %c0_i32_11 : i32
    scf.if %17 {
      %c0_12 = arith.constant 0 : index
      %c0_13 = arith.constant 0 : index
      %c0_14 = arith.constant 0 : index
      %18 = vector.load %arg5[%c0_12, %c0_13, %c0_14] : memref<1x32x1xf32, #tpu.memory_space<vmem>>, vector<1x32x1xf32>
      %19 = vector.shape_cast %18 : vector<1x32x1xf32> to vector<32x1xf32>
      %20 = arith.addf %19, %8 : vector<32x1xf32>
      %c0_15 = arith.constant 0 : index
      %c0_16 = arith.constant 0 : index
      %c0_17 = arith.constant 0 : index
      %21 = vector.load %arg5[%c0_15, %c0_16, %c0_17] : memref<1x32x1xf32, #tpu.memory_space<vmem>>, vector<1x32x1xf32>
      %22 = vector.shape_cast %21 : vector<1x32x1xf32> to vector<32x1xf32>
      %23 = vector.shape_cast %20 : vector<32x1xf32> to vector<1x32x1xf32>
      tpu.vector_store %arg5[%c0_15, %c0_16, %c0_17], %23 {strides = array<i32>} : memref<1x32x1xf32, #tpu.memory_space<vmem>>, vector<1x32x1xf32>,
      %c0_18 = arith.constant 0 : index
      %c0_19 = arith.constant 0 : index
      %c0_20 = arith.constant 0 : index
      %24 = vector.load %arg6[%c0_18, %c0_19, %c0_20] : memref<1x32x1xf32, #tpu.memory_space<vmem>>, vector<1x32x1xf32>
      %25 = vector.shape_cast %24 : vector<1x32x1xf32> to vector<32x1xf32>
      %26 = arith.addf %25, %11 : vector<32x1xf32>
      %c0_21 = arith.constant 0 : index
      %c0_22 = arith.constant 0 : index
      %c0_23 = arith.constant 0 : index
      %27 = vector.load %arg6[%c0_21, %c0_22, %c0_23] : memref<1x32x1xf32, #tpu.memory_space<vmem>>, vector<1x32x1xf32>
      %28 = vector.shape_cast %27 : vector<1x32x1xf32> to vector<32x1xf32>
      %29 = vector.shape_cast %26 : vector<32x1xf32> to vector<1x32x1xf32>
      tpu.vector_store %arg6[%c0_21, %c0_22, %c0_23], %29 {strides = array<i32>} : memref<1x32x1xf32, #tpu.memory_space<vmem>>, vector<1x32x1xf32>,
    } else {
    }
    return
  }
  func.func @transform_0(%arg0: i32, %arg1: i32) -> (i32, i32, i32) {
    %c0_i32 = arith.constant 0 : i32
    %c0_i32_0 = arith.constant 0 : i32
    return %arg0, %c0_i32, %arg1 : i32, i32, i32
  }
  func.func @transform_1(%arg0: i32, %arg1: i32) -> (i32, i32) {
    %c0_i32 = arith.constant 0 : i32
    %c0_i32_0 = arith.constant 0 : i32
    %c0_i32_1 = arith.constant 0 : i32
    return %c0_i32, %c0_i32_0 : i32, i32
  }
  func.func @transform_2(%arg0: i32, %arg1: i32) -> (i32, i32, i32) {
    %c0_i32 = arith.constant 0 : i32
    %c0_i32_0 = arith.constant 0 : i32
    return %arg0, %c0_i32, %arg1 : i32, i32, i32
  }
  func.func @transform_3(%arg0: i32, %arg1: i32) -> (i32, i32, i32) {
    %c0_i32 = arith.constant 0 : i32
    %c0_i32_0 = arith.constant 0 : i32
    %c0_i32_1 = arith.constant 0 : i32
    return %arg0, %c0_i32, %c0_i32_0 : i32, i32, i32
  }
  func.func @transform_4(%arg0: i32, %arg1: i32) -> (i32, i32, i32) {
    %c0_i32 = arith.constant 0 : i32
    %c0_i32_0 = arith.constant 0 : i32
    %c0_i32_1 = arith.constant 0 : i32
    return %arg0, %c0_i32, %c0_i32_0 : i32, i32, i32
  }
}

</mosaic_0001>

<llo_original>
// kernel: tpu_custom_call.1
$region0: #{tpu_custom_call.1}
  #allocation0 [shape = 'u32[]', space=smem, size = 0x4, offset = 0x4, fixed_abs, tag = 'smem constant byte address 0x4 - core index']
  #allocation1 [shape = 'u32[144,128]{1,0:T(1,128)}', space=vmem, size = 0x12000, scoped, tag = 'internal scratch']
  %s0 = inlined_call_operand.vmem [shape: bf16[2,36,256], index: 0, kind: input, shape index: {}]
  %s1 = inlined_call_operand.vmem [shape: bf16[32,36], index: 1, kind: input, shape index: {}]
  %s2 = inlined_call_operand.hbm [shape: f32[2,32,256], index: 2, kind: output, shape index: {0}]
  %s3 = inlined_call_operand.vmem [shape: f32[2,32,1], index: 3, kind: output, shape index: {1}]
  %s4 = inlined_call_operand.vmem [shape: f32[2,32,1], index: 4, kind: output, shape index: {2}]
  %5 = xla_tuple %s2, %s3, %s4
  %s6 = sld [smem:[#allocation0]]
  $region106: #{tpu_custom_call.1} parent=0
    _
  %s8 = ssub.s32 1, %s6
  %s9 = scalar_select 0, %s8, %s6
  $region1: #{tpu_custom_call.1} parent=0
    #allocation2 [shape = 'u8[20480]{0}', space=vmem, size = 0x5000, scoped, tag = 'input window, operand 0']
    #allocation3 [shape = 'u8[32768]{0}', space=vmem, size = 0x8000, scoped, tag = 'output window, operand 0']
    #allocation4 [shape = 's32[2]{0}', space=sflag, size = 0x8, scoped, tag = 'scoped memory for tpu_custom_call.1']
    %10 = vsyncpa [#allocation4], 0
    %s11 = scalar_lea.sflag [#allocation4], 1
    %12 = vsyncpa %s11, 0
    loop: start=0, step=1, limit=6
    $region2: #{tpu_custom_call.1} parent=1 // loop_pre_header
      _
    $region3: #{tpu_custom_call.1} parent=1 // loop_header
      %s14 = sphi 0, %s18
      %p15 = scmp.ge.s32.totalorder %s14, 6
      %s21 = sphi 0, %s33
      %s22 = sphi 0, %s29
      %s23 = sphi 0, %s21
      %s24 = sphi 0, %s22
      %s25 = sphi 0, %s23
      %s26 = sphi 0, %s24
      %s38 = sphi 0, %s40
      %s41 = sphi 0, %s38
      %s42 = sphi 0, %s41
      %s58 = sphi 0, %s42
      %s62 = sphi 0, %s62
      %s64 = sphi 0, %s62
      %s65 = sphi 0, %s64
      %s79 = sphi 0, %s65
      %s87 = sphi 0, %s89
      %s90 = sphi 0, %s87
      %s91 = sphi 0, %s90
      %s107 = sphi 0, %s91
      %s113 = sphi 0, %s115
      %s116 = sphi 0, %s113
      %s117 = sphi 0, %s116
      %s133 = sphi 0, %s117
      %s139 = sphi 0, %s141
      %s142 = sphi 0, %s139
      %s143 = sphi 0, %s142
      %s159 = sphi 0, %s143
    $region4: #{tpu_custom_call.1} parent=1 // loop_header_branch
      %17 = sbr.rel (%p15) target = $region8
    $region5: #{tpu_custom_call.1} parent=1 // loop_body
      %s19 = ssub.s32 %s14, 1
      %s20 = ssub.s32 %s14, 2
      %s27 = sadd.s32 1, %s22
      %p28 = scmp.ge.s32.totalorder %s27, 2
      %s29 = scalar_select %p28, 0, %s27
      %s30 = sadd.s32 1, %s21
      %s31 = scalar_select %p28, %s30, %s21
      %p32 = scmp.ge.s32.totalorder %s31, 2
      %s33 = scalar_select %p32, 0, %s31
      %s34 = ssub.s32 %s21, %s33
      %s35 = ssub.s32 %s22, %s29
      %s36 = sor.u32 %s34, %s35
      %p37 = scmp.eq.s32.totalorder %s36, 0
      %s39 = sadd.s32 %s38, 1
      %s40 = scalar_select %p37, %s38, %s39
      %p43 = pneg %p37
      %p44 = scmp.eq.s32.totalorder %s14, 3
      %p45 = por %p43, %p44
      %p46 = scmp.ne.s32.totalorder %s38, %s41
      %p47 = scmp.eq.s32.totalorder %s14, 0
      %p48 = por %p46, %p47
      %p49 = scmp.ne.s32.totalorder %s38, %s41
      %p50 = scmp.eq.s32.totalorder %s19, 3
      %p51 = por %p49, %p50
      %p52 = scmp.ne.s32.totalorder %s41, %s42
      %p53 = scmp.eq.s32.totalorder %s19, 0
      %p54 = por %p52, %p53
      %p55 = scmp.ne.s32.totalorder %s41, %s42
      %p56 = scmp.eq.s32.totalorder %s20, 3
      %p57 = por %p55, %p56
      %p59 = scmp.ne.s32.totalorder %s42, %s58
      %p60 = scmp.eq.s32.totalorder %s20, 0
      %p61 = por %p59, %p60
      %s63 = sadd.s32 %s62, 1
      %p66 = scmp.eq.s32.totalorder %s14, 3
      %p67 = scmp.ne.s32.totalorder %s62, %s64
      %p68 = scmp.eq.s32.totalorder %s14, 0
      %p69 = por %p67, %p68
      %p70 = scmp.ne.s32.totalorder %s62, %s64
      %p71 = scmp.eq.s32.totalorder %s19, 3
      %p72 = por %p70, %p71
      %p73 = scmp.ne.s32.totalorder %s64, %s65
      %p74 = scmp.eq.s32.totalorder %s19, 0
      %p75 = por %p73, %p74
      %p76 = scmp.ne.s32.totalorder %s64, %s65
      %p77 = scmp.eq.s32.totalorder %s20, 3
      %p78 = por %p76, %p77
      %p80 = scmp.ne.s32.totalorder %s65, %s79
      %p81 = scmp.eq.s32.totalorder %s20, 0
      %p82 = por %p80, %p81
      %s83 = ssub.s32 %s21, %s33
      %s84 = ssub.s32 %s22, %s29
      %s85 = sor.u32 %s83, %s84
      %p86 = scmp.eq.s32.totalorder %s85, 0
      %s88 = sadd.s32 %s87, 1
      %s89 = scalar_select %p86, %s87, %s88
      %p92 = pneg %p86
      %p93 = scmp.eq.s32.totalorder %s14, 3
      %p94 = por %p92, %p93
      %p95 = scmp.ne.s32.totalorder %s87, %s90
      %p96 = scmp.eq.s32.totalorder %s14, 0
      %p97 = por %p95, %p96
      %p98 = scmp.ne.s32.totalorder %s87, %s90
      %p99 = scmp.eq.s32.totalorder %s19, 3
      %p100 = por %p98, %p99
      %p101 = scmp.ne.s32.totalorder %s90, %s91
      %p102 = scmp.eq.s32.totalorder %s19, 0
      %p103 = por %p101, %p102
      %p104 = scmp.ne.s32.totalorder %s90, %s91
      %p105 = scmp.eq.s32.totalorder %s20, 3
      %p106 = por %p104, %p105
      %p108 = scmp.ne.s32.totalorder %s91, %s107
      %p109 = scmp.eq.s32.totalorder %s20, 0
      %p110 = por %p108, %p109
      %s111 = ssub.s32 %s21, %s33
      %p112 = scmp.eq.s32.totalorder %s111, 0
      %s114 = sadd.s32 %s113, 1
      %s115 = scalar_select %p112, %s113, %s114
      %p118 = pneg %p112
      %p119 = scmp.eq.s32.totalorder %s14, 3
      %p120 = por %p118, %p119
      %p121 = scmp.ne.s32.totalorder %s113, %s116
      %p122 = scmp.eq.s32.totalorder %s14, 0
      %p123 = por %p121, %p122
      %p124 = scmp.ne.s32.totalorder %s113, %s116
      %p125 = scmp.eq.s32.totalorder %s19, 3
      %p126 = por %p124, %p125
      %p127 = scmp.ne.s32.totalorder %s116, %s117
      %p128 = scmp.eq.s32.totalorder %s19, 0
      %p129 = por %p127, %p128
      %p130 = scmp.ne.s32.totalorder %s116, %s117
      %p131 = scmp.eq.s32.totalorder %s20, 3
      %p132 = por %p130, %p131
      %p134 = scmp.ne.s32.totalorder %s117, %s133
      %p135 = scmp.eq.s32.totalorder %s20, 0
      %p136 = por %p134, %p135
      %s137 = ssub.s32 %s21, %s33
      %p138 = scmp.eq.s32.totalorder %s137, 0
      %s140 = sadd.s32 %s139, 1
      %s141 = scalar_select %p138, %s139, %s140
      %p144 = pneg %p138
      %p145 = scmp.eq.s32.totalorder %s14, 3
      %p146 = por %p144, %p145
      %p147 = scmp.ne.s32.totalorder %s139, %s142
      %p148 = scmp.eq.s32.totalorder %s14, 0
      %p149 = por %p147, %p148
      %p150 = scmp.ne.s32.totalorder %s139, %s142
      %p151 = scmp.eq.s32.totalorder %s19, 3
      %p152 = por %p150, %p151
      %p153 = scmp.ne.s32.totalorder %s142, %s143
      %p154 = scmp.eq.s32.totalorder %s19, 0
      %p155 = por %p153, %p154
      %p156 = scmp.ne.s32.totalorder %s142, %s143
      %p157 = scmp.eq.s32.totalorder %s20, 3
      %p158 = por %p156, %p157
      %p160 = scmp.ne.s32.totalorder %s143, %s159
      %p161 = scmp.eq.s32.totalorder %s20, 0
      %p162 = por %p160, %p161
      %p163 = scmp.le.s32.totalorder 1, %s14
      %p164 = scmp.lt.s32.totalorder %s14, 5
      %p165 = pnand %p163, %p164
      %p166 = pneg %p165
      // Predicated region
      $region9: #{tpu_custom_call.1} parent=5 // pred_check
        _
      $region10: #{tpu_custom_call.1} parent=5 // pred_check_branch
        %168 = sbr.rel (%p165) target = $region12
      $region11: #{tpu_custom_call.1} parent=5 // pred_region
        %s169 = ssub.s32 %s14, 1
        // Predicated region
        $region13: #{tpu_custom_call.1} parent=11 // pred_check
          %p170 = pneg %p75
        $region14: #{tpu_custom_call.1} parent=11 // pred_check_branch
          %172 = sbr.rel (%p170) target = $region16
        $region15: #{tpu_custom_call.1} parent=11 // pred_region
          _
        $region16: #{tpu_custom_call.1} parent=11 // pred_fallthru
          _
      $region12: #{tpu_custom_call.1} parent=5 // pred_fallthru
        _
      %p173 = scmp.lt.s32.totalorder %s14, 4
      // Predicated region
      $region17: #{tpu_custom_call.1} parent=5 // pred_check
        %p174 = pneg %p173
      $region18: #{tpu_custom_call.1} parent=5 // pred_check_branch
        %176 = sbr.rel (%p174) target = $region20
      $region19: #{tpu_custom_call.1} parent=5 // pred_region
        // Predicated region
        $region21: #{tpu_custom_call.1} parent=19 // pred_check
          %p177 = pneg %p48
        $region22: #{tpu_custom_call.1} parent=19 // pred_check_branch
          %179 = sbr.rel (%p177) target = $region24
        $region23: #{tpu_custom_call.1} parent=19 // pred_region
          %s180 = sand.u32 %s38, 1
          %s181 = sand.u32 %s38, 1
          %s182 = smul.addr %s181, 20
          %s183 = scalar_lea.vmem [#allocation2], %s182
          %s184 = smul.addr %s21, 10
          %s185 = sadd.s32 %s22, %s184
          %s186 = smul.addr %s185, 4
          %s187 = scalar_lea.vmem %s0, %s186
          // Predicated region
          $region25: #{tpu_custom_call.1} parent=23 // pred_check
            _
          $region26: #{tpu_custom_call.1} parent=23 // pred_check_branch
            %189 = sbr.rel (0) target = $region28
          $region27: #{tpu_custom_call.1} parent=23 // pred_region
            // Predicated region
            $region29: #{tpu_custom_call.1} parent=27 // pred_check
              _
            $region30: #{tpu_custom_call.1} parent=27 // pred_check_branch
              %191 = sbr.rel target = $region32
            $region31: #{tpu_custom_call.1} parent=27 // pred_region
              // Predicated region
              $region44: #{tpu_custom_call.1} parent=31 // pred_check
                _
              $region45: #{tpu_custom_call.1} parent=31 // pred_check_branch
                %214 = sbr.rel (0) target = $region47
              $region46: #{tpu_custom_call.1} parent=31 // pred_region
                loop: start=0, step=1, limit=1
                $region48: #{tpu_custom_call.1} parent=46 // loop_pre_header
                  _
                $region49: #{tpu_custom_call.1} parent=46 // loop_header
                  %s216 = sphi 0, %s220
                  %p217 = scmp.ge.s32.totalorder %s216, 1
                  %s221 = sphi %s187, %s187
                  %s222 = sphi %s183, %s183
                $region50: #{tpu_custom_call.1} parent=46 // loop_header_branch
                  %219 = sbr.rel (%p217) target = $region54
                $region51: #{tpu_custom_call.1} parent=46 // loop_body
                  _
                $region52: #{tpu_custom_call.1} parent=46 // loop_footer
                  %s220 = sadd.s32 1, %s216
                $region53: #{tpu_custom_call.1} parent=46 // loop_footer_branch
                  %215 = sbr.rel target = $region49
                $region54: #{tpu_custom_call.1} parent=46 // loop_exit
                  _
                loop: start=0, step=1, limit=1
                $region55: #{tpu_custom_call.1} parent=46 // loop_pre_header
                  _
                $region56: #{tpu_custom_call.1} parent=46 // loop_header
                  %s225 = sphi 0, %s229
                  %p226 = scmp.ge.s32.totalorder %s225, 1
                  %s230 = sphi %s187, %s187
                  %s231 = sphi %s183, %s183
                $region57: #{tpu_custom_call.1} parent=46 // loop_header_branch
                  %228 = sbr.rel (%p226) target = $region61
                $region58: #{tpu_custom_call.1} parent=46 // loop_body
                  %v232 = vld [vmem:[%s230] sm:$0xf]
                  %233 = vst [vmem:[%s231] sm:$0xf] %v232
                  %v234 = vld [vmem:[%s230 + $0x8] sm:$0xf]
                  %235 = vst [vmem:[%s231 + $0x4] sm:$0xf] %v234
                  %v236 = vld [vmem:[%s230 + $0x10] sm:$0xf]
                  %237 = vst [vmem:[%s231 + $0x8] sm:$0xf] %v236
                  %v238 = vld [vmem:[%s230 + $0x18] sm:$0xf]
                  %239 = vst [vmem:[%s231 + $0xc] sm:$0xf] %v238
                  %v240 = vld [vmem:[%s230 + $0x20] sm:$0xf]
                  %241 = vst [vmem:[%s231 + $0x10] sm:$0xf] %v240
                $region59: #{tpu_custom_call.1} parent=46 // loop_footer
                  %s229 = sadd.s32 1, %s225
                $region60: #{tpu_custom_call.1} parent=46 // loop_footer_branch
                  %224 = sbr.rel target = $region56
                $region61: #{tpu_custom_call.1} parent=46 // loop_exit
                  _
              $region47: #{tpu_custom_call.1} parent=31 // pred_fallthru
                _
            $region32: #{tpu_custom_call.1} parent=27 // pred_fallthru
              _
            // Predicated region
            $region33: #{tpu_custom_call.1} parent=27 // pred_check
              _
            $region34: #{tpu_custom_call.1} parent=27 // pred_check_branch
              %193 = sbr.rel (0) target = $region36
            $region35: #{tpu_custom_call.1} parent=27 // pred_region
              loop: start=0, step=1, limit=1
              $region37: #{tpu_custom_call.1} parent=35 // loop_pre_header
                _
              $region38: #{tpu_custom_call.1} parent=35 // loop_header
                %s196 = sphi 0, %s200
                %p197 = scmp.ge.s32.totalorder %s196, 1
                %s201 = sphi %s187, %s187
                %s202 = sphi %s183, %s183
              $region39: #{tpu_custom_call.1} parent=35 // loop_header_branch
                %199 = sbr.rel (%p197) target = $region43
              $region40: #{tpu_custom_call.1} parent=35 // loop_body
                %v203 = vld [vmem:[%s201] sm:$0xf]
                %204 = vst [vmem:[%s202] sm:$0xf] %v203
                %v205 = vld [vmem:[%s201 + $0x8] sm:$0xf]
                %206 = vst [vmem:[%s202 + $0x4] sm:$0xf] %v205
                %v207 = vld [vmem:[%s201 + $0x10] sm:$0xf]
                %208 = vst [vmem:[%s202 + $0x8] sm:$0xf] %v207
                %v209 = vld [vmem:[%s201 + $0x18] sm:$0xf]
                %210 = vst [vmem:[%s202 + $0xc] sm:$0xf] %v209
                %v211 = vld [vmem:[%s201 + $0x20] sm:$0xf]
                %212 = vst [vmem:[%s202 + $0x10] sm:$0xf] %v211
              $region41: #{tpu_custom_call.1} parent=35 // loop_footer
                %s200 = sadd.s32 1, %s196
              $region42: #{tpu_custom_call.1} parent=35 // loop_footer_branch
                %195 = sbr.rel target = $region38
              $region43: #{tpu_custom_call.1} parent=35 // loop_exit
                _
            $region36: #{tpu_custom_call.1} parent=27 // pred_fallthru
              _
          $region28: #{tpu_custom_call.1} parent=23 // pred_fallthru
            _
          %242 = vnop
        $region24: #{tpu_custom_call.1} parent=19 // pred_fallthru
          _
      $region20: #{tpu_custom_call.1} parent=5 // pred_fallthru
        _
      %p243 = scmp.le.s32.totalorder 1, %s14
      %p244 = scmp.lt.s32.totalorder %s14, 5
      %p245 = pnand %p243, %p244
      %p246 = pneg %p245
      // Predicated region
      $region62: #{tpu_custom_call.1} parent=5 // pred_check
        _
      $region63: #{tpu_custom_call.1} parent=5 // pred_check_branch
        %248 = sbr.rel (%p245) target = $region65
      $region64: #{tpu_custom_call.1} parent=5 // pred_region
        %s249 = ssub.s32 %s14, 1
        %s250 = sand.u32 %s41, 1
        %s251 = sand.u32 %s41, 1
        %s252 = smul.addr %s251, 20
        %s253 = scalar_lea.vmem [#allocation2], %s252
        // Predicated region
        $region66: #{tpu_custom_call.1} parent=64 // pred_check
          %p254 = pneg %p54
        $region67: #{tpu_custom_call.1} parent=64 // pred_check_branch
          %256 = sbr.rel (%p254) target = $region69
        $region68: #{tpu_custom_call.1} parent=64 // pred_region
          _
        $region69: #{tpu_custom_call.1} parent=64 // pred_fallthru
          _
        %s257 = sand.u32 %s41, 1
        %s258 = sand.u32 %s41, 1
        %s259 = smul.addr %s258, 20
        %s260 = scalar_lea.vmem [#allocation2], %s259
        %p261 = pneg %p54
        %p262 = pneg %p51
        %p263 = pneg %p75
        %p264 = pneg %p72
        %p265 = pneg %p103
        %p266 = pneg %p100
        %s267 = sand.u32 %s90, 1
        %s268 = scalar_lea.sflag [#allocation4], %s267
        %s269 = sand.u32 %s90, 1
        %s270 = smul.addr %s269, 32
        %s271 = scalar_lea.vmem [#allocation3], %s270
        %p272 = pneg %p129
        %p273 = pneg %p126
        %p274 = scmp.lt.s32.totalorder %s23, 1
        %s275 = scalar_select %p274, %s23, 1
        %s276 = smul.addr %s275, 4
        %s277 = smul.addr %s276, 8
        %s278 = scalar_lea.vmem %s3, %s277
        %p279 = pneg %p155
        %p280 = pneg %p152
        %p281 = scmp.lt.s32.totalorder %s23, 1
        %s282 = scalar_select %p281, %s23, 1
        %s283 = smul.addr %s282, 4
        %s284 = smul.addr %s283, 8
        %s285 = scalar_lea.vmem %s4, %s284
        %p286 = scmp.lt.s32.totalorder %s23, 1
        %s287 = scalar_select %p286, %s23, 1
        %s288 = smul.addr %s287, 4
        %s289 = smul.addr %s288, 8
        %s290 = scalar_lea.vmem %s3, %s289
        %p291 = scmp.lt.s32.totalorder %s23, 1
        %s292 = scalar_select %p291, %s23, 1
        %s293 = smul.addr %s292, 4
        %s294 = smul.addr %s293, 8
        %s295 = scalar_lea.vmem %s4, %s294
        %v297 = vld [vmem:[%s1] sm:$0xf]
        %v298 = vld [vmem:[%s1 + $0x4] sm:$0xf]
        %v299 = vld [vmem:[%s1 + $0x8] sm:$0xf]
        %v300 = vld [vmem:[%s1 + $0xc] sm:$0xf]
        %v301 = vld [vmem:[%s253] sm:$0xf]
        %v302 = vld [vmem:[%s253 + $0x4] sm:$0xf]
        %v303 = vld [vmem:[%s253 + $0x8] sm:$0xf]
        %v304 = vld [vmem:[%s253 + $0xc] sm:$0xf]
        %v305 = vld [vmem:[%s253 + $0x10] sm:$0x3]
        %v310 = vunpack.c.l.b16 %v297
        %v311 = vunpack.c.l.b16 %v298
        %v312 = vunpack.c.l.b16 %v299
        %v313 = vunpack.c.l.b16 %v300
        %v314 = vpack.c.b16 %v311, %v310
        %v315 = vpack.c.b16 %v313, %v312
        %v321 = vunpack.c.l.b16 %v301
        %v322 = vunpack.c.l.b16 %v302
        %v323 = vunpack.c.l.b16 %v303
        %v324 = vunpack.c.l.b16 %v304
        %v325 = vunpack.c.l.b16 %v305
        %v326 = vpack.c.b16 %v322, %v321
        %v327 = vpack.c.b16 %v324, %v323
        %v328 = vpack.c.b16 %v325, %v325
        %vm331 = vcmask 293888
        %v333 = vsel %vm331, %v314, 0
        %v336 = vsel %vm331, %v315, 0
        %vm338 = vcmask 1041408
        %v340 = vsel %vm338, %v328, 0
        %342 = vmatprep.subr.bf16.mxu0 0
        %343 = vmatpush1.bf16.msra.mxu0 %v326
        %344 = vmatprep.subr.bf16.mxu0 0
        %345 = vmatpush1.bf16.msra.mxu0 %v327
        %346 = vmatprep.subr.bf16.mxu0 0
        %347 = vmatpush1.bf16.msra.mxu0 %v340
        %348 = vmatprep.subr.bf16.mxu0 0
        %349 = vmatpush1.bf16.msra.mxu0 0
        %350 = vmatprep.subr.bf16.mxu0 0
        %351 = vmatpush1.bf16.msra.mxu0 0
        %352 = vmatprep.subr.bf16.mxu0 0
        %353 = vmatpush1.bf16.msra.mxu0 0
        %354 = vmatprep.subr.bf16.mxu0 0
        %355 = vmatpush1.bf16.msra.mxu0 0
        %356 = vmatprep.subr.bf16.mxu0 0
        %357 = vmatpush1.bf16.msra.mxu0 0
        %358 = vmatprep.subr.bf16.mxu0 0
        %359 = vmatpush1.bf16.msra.mxu0 0
        %360 = vmatprep.subr.bf16.mxu0 0
        %361 = vmatpush1.bf16.msra.mxu0 0
        %362 = vmatprep.subr.bf16.mxu0 0
        %363 = vmatpush1.bf16.msra.mxu0 0
        %364 = vmatprep.subr.bf16.mxu0 0
        %365 = vmatpush1.bf16.msra.mxu0 0
        %366 = vmatprep.subr.bf16.mxu0 0
        %367 = vmatpush1.bf16.msra.mxu0 0
        %368 = vmatprep.subr.bf16.mxu0 0
        %369 = vmatpush1.bf16.msra.mxu0 0
        %370 = vmatprep.subr.bf16.mxu0 0
        %371 = vmatpush1.bf16.msra.mxu0 0
        %372 = vmatprep.subr.bf16.mxu0 0
        %373 = vmatpush1.bf16.msra.mxu0 0
        %374 = vmatprep.mubr.bf16.mxu0 0
        %375 = vmatmul.mubr.bf16.gmra.mrb[0].mxu0 %v333
        %v376 = vpop.f32.mrb[0].mxu0
        %v377 = vadd.f32 0.0, %v376
        %v378 = vpop.f32.mrb[0].mxu0
        %v379 = vpop.f32.mrb[0].mxu0
        %v380 = vadd.f32 0.0, %v379
        %v381 = vpop.f32.mrb[0].mxu0
        %382 = vmatprep.mubr.bf16.mxu0 0
        %383 = vmatmul.mubr.bf16.gmra.mrb[0].mxu0 %v336
        %v384 = vpop.f32.mrb[0].mxu0
        %v385 = vadd.f32 0.0, %v384
        %v386 = vpop.f32.mrb[0].mxu0
        %v387 = vpop.f32.mrb[0].mxu0
        %v388 = vadd.f32 0.0, %v387
        %v389 = vpop.f32.mrb[0].mxu0
        %390 = vdwg.mxu0
        %391 = vst [vmem:[%s271] sm:$0xff] %v377
        %392 = vst [vmem:[%s271 + $0x8] sm:$0xff] %v380
        %393 = vst [vmem:[%s271 + $0x10] sm:$0xff] %v385
        %394 = vst [vmem:[%s271 + $0x18] sm:$0xff] %v388
        %395 = vadd.xlane.f32.xlu0 %v377
        %v396 = vpop.xlane.xlu0 %395
        %397 = vadd.xlane.f32.xlu0 %v380
        %v398 = vpop.xlane.xlu0 %397
        %399 = vadd.xlane.f32.xlu0 %v385
        %v400 = vpop.xlane.xlu0 %399
        %401 = vadd.xlane.f32.xlu0 %v388
        %v402 = vpop.xlane.xlu0 %401
        %v403 = vmul.f32 %v377, %v377
        %v404 = vmul.f32 %v380, %v380
        %v405 = vmul.f32 %v385, %v385
        %v406 = vmul.f32 %v388, %v388
        %407 = vadd.xlane.f32.xlu0 %v403
        %v408 = vpop.xlane.xlu0 %407
        %409 = vadd.xlane.f32.xlu0 %v404
        %v410 = vpop.xlane.xlu0 %409
        %411 = vadd.xlane.f32.xlu0 %v405
        %v412 = vpop.xlane.xlu0 %411
        %413 = vadd.xlane.f32.xlu0 %v406
        %v414 = vpop.xlane.xlu0 %413
        %p415 = scmp.eq.s32.totalorder %s24, 0
        // Predicated region
        $region70: #{tpu_custom_call.1} parent=64 // pred_check
          %p416 = pneg %p415
        $region71: #{tpu_custom_call.1} parent=64 // pred_check_branch
          %418 = sbr.rel (%p416) target = $region73
        $region72: #{tpu_custom_call.1} parent=64 // pred_region
          %vm419 = vcmask 7168
          %420 = vst.msk [vmem:[%s290] sm:$0xff] %vm419, %v396
          %421 = vst.msk [vmem:[%s290 + $0x8] sm:$0xff] %vm419, %v398
          %422 = vst.msk [vmem:[%s290 + $0x10] sm:$0xff] %vm419, %v400
          %423 = vst.msk [vmem:[%s290 + $0x18] sm:$0xff] %vm419, %v402
          %424 = vst.msk [vmem:[%s295] sm:$0xff] %vm419, %v408
          %425 = vst.msk [vmem:[%s295 + $0x8] sm:$0xff] %vm419, %v410
          %426 = vst.msk [vmem:[%s295 + $0x10] sm:$0xff] %vm419, %v412
          %427 = vst.msk [vmem:[%s295 + $0x18] sm:$0xff] %vm419, %v414
        $region73: #{tpu_custom_call.1} parent=64 // pred_fallthru
          _
        %p428 = scmp.gt.s32.totalorder %s24, 0
        // Predicated region
        $region74: #{tpu_custom_call.1} parent=64 // pred_check
          %p429 = pneg %p428
        $region75: #{tpu_custom_call.1} parent=64 // pred_check_branch
          %431 = sbr.rel (%p429) target = $region77
        $region76: #{tpu_custom_call.1} parent=64 // pred_region
          %v432 = vld [vmem:[%s290] sm:$0xff]
          %v433 = vld [vmem:[%s290 + $0x8] sm:$0xff]
          %v434 = vld [vmem:[%s290 + $0x10] sm:$0xff]
          %v435 = vld [vmem:[%s290 + $0x18] sm:$0xff]
          %v436 = vadd.f32 %v432, %v396
          %v437 = vadd.f32 %v433, %v398
          %v438 = vadd.f32 %v434, %v400
          %v439 = vadd.f32 %v435, %v402
          %vm440 = vcmask 7168
          %441 = vst.msk [vmem:[%s290] sm:$0xff] %vm440, %v436
          %442 = vst.msk [vmem:[%s290 + $0x8] sm:$0xff] %vm440, %v437
          %443 = vst.msk [vmem:[%s290 + $0x10] sm:$0xff] %vm440, %v438
          %444 = vst.msk [vmem:[%s290 + $0x18] sm:$0xff] %vm440, %v439
          %v445 = vld [vmem:[%s295] sm:$0xff]
          %v446 = vld [vmem:[%s295 + $0x8] sm:$0xff]
          %v447 = vld [vmem:[%s295 + $0x10] sm:$0xff]
          %v448 = vld [vmem:[%s295 + $0x18] sm:$0xff]
          %v449 = vadd.f32 %v445, %v408
          %v450 = vadd.f32 %v446, %v410
          %v451 = vadd.f32 %v447, %v412
          %v452 = vadd.f32 %v448, %v414
          %453 = vst.msk [vmem:[%s295] sm:$0xff] %vm440, %v449
          %454 = vst.msk [vmem:[%s295 + $0x8] sm:$0xff] %vm440, %v450
          %455 = vst.msk [vmem:[%s295 + $0x10] sm:$0xff] %vm440, %v451
          %456 = vst.msk [vmem:[%s295 + $0x18] sm:$0xff] %vm440, %v452
        $region77: #{tpu_custom_call.1} parent=64 // pred_fallthru
          _
        %s457 = sand.u32 %s90, 1
        %s458 = scalar_lea.sflag [#allocation4], %s457
        %s459 = sand.u32 %s90, 1
        %s460 = smul.addr %s459, 32
        %s461 = scalar_lea.vmem [#allocation3], %s460
        %p462 = scmp.lt.s32.totalorder %s23, 1
        %s463 = scalar_select %p462, %s23, 1
        %s464 = smul.addr %s463, 4
        %s465 = smul.addr %s464, 8
        %s466 = scalar_lea.vmem %s3, %s465
        %p467 = scmp.lt.s32.totalorder %s23, 1
        %s468 = scalar_select %p467, %s23, 1
        %s469 = smul.addr %s468, 4
        %s470 = smul.addr %s469, 8
        %s471 = scalar_lea.vmem %s4, %s470
        // Predicated region
        $region78: #{tpu_custom_call.1} parent=64 // pred_check
          %p472 = pneg %p100
        $region79: #{tpu_custom_call.1} parent=64 // pred_check_branch
          %474 = sbr.rel (%p472) target = $region81
        $region80: #{tpu_custom_call.1} parent=64 // pred_region
          %s476 = ssub.s32 512, 512
          %477 = vsyncadd %s458, %s476
          %s478 = smul.addr %s23, 8
          %s479 = sadd.s32 %s24, %s478
          %s480 = smul.addr %s479, 128
          %s481 = scalar_lea.hbm %s2, %s480
          %s482 = sshll.u32 %s461, 4
          %s483 = int_to_ptr.vmem [resolvable:$true] %s482
          %488 = dma.vmem_to_hbm [thread:$0]  %s483, 512, %s481, %s458, 128, 256, 8
        $region81: #{tpu_custom_call.1} parent=64 // pred_fallthru
          _
        // Predicated region
        $region82: #{tpu_custom_call.1} parent=64 // pred_check
          %p489 = pneg %p126
        $region83: #{tpu_custom_call.1} parent=64 // pred_check_branch
          %491 = sbr.rel (%p489) target = $region85
        $region84: #{tpu_custom_call.1} parent=64 // pred_region
          _
        $region85: #{tpu_custom_call.1} parent=64 // pred_fallthru
          _
        // Predicated region
        $region86: #{tpu_custom_call.1} parent=64 // pred_check
          %p492 = pneg %p152
        $region87: #{tpu_custom_call.1} parent=64 // pred_check_branch
          %494 = sbr.rel (%p492) target = $region89
        $region88: #{tpu_custom_call.1} parent=64 // pred_region
          _
        $region89: #{tpu_custom_call.1} parent=64 // pred_fallthru
          _
      $region65: #{tpu_custom_call.1} parent=5 // pred_fallthru
        _
      %p495 = scmp.le.s32.totalorder 2, %s14
      // Predicated region
      $region90: #{tpu_custom_call.1} parent=5 // pred_check
        %p496 = pneg %p495
      $region91: #{tpu_custom_call.1} parent=5 // pred_check_branch
        %498 = sbr.rel (%p496) target = $region93
      $region92: #{tpu_custom_call.1} parent=5 // pred_region
        %s499 = ssub.s32 %s14, 2
        // Predicated region
        $region94: #{tpu_custom_call.1} parent=92 // pred_check
          %p500 = pneg %p106
        $region95: #{tpu_custom_call.1} parent=92 // pred_check_branch
          %502 = sbr.rel (%p500) target = $region97
        $region96: #{tpu_custom_call.1} parent=92 // pred_region
          %s503 = sand.u32 %s91, 1
          %s504 = scalar_lea.sflag [#allocation4], %s503
          %s505 = sand.u32 %s91, 1
          %s506 = smul.addr %s505, 32
          %s507 = scalar_lea.vmem [#allocation3], %s506
          %508 = dma.done %s504, 512
        $region97: #{tpu_custom_call.1} parent=92 // pred_fallthru
          _
        // Predicated region
        $region98: #{tpu_custom_call.1} parent=92 // pred_check
          %p509 = pneg %p132
        $region99: #{tpu_custom_call.1} parent=92 // pred_check_branch
          %511 = sbr.rel (%p509) target = $region101
        $region100: #{tpu_custom_call.1} parent=92 // pred_region
          %p512 = scmp.lt.s32.totalorder %s25, 1
          %s513 = scalar_select %p512, %s25, 1
          %s514 = smul.addr %s513, 4
          %s515 = smul.addr %s514, 8
          %s516 = scalar_lea.vmem %s3, %s515
        $region101: #{tpu_custom_call.1} parent=92 // pred_fallthru
          _
        // Predicated region
        $region102: #{tpu_custom_call.1} parent=92 // pred_check
          %p517 = pneg %p158
        $region103: #{tpu_custom_call.1} parent=92 // pred_check_branch
          %519 = sbr.rel (%p517) target = $region105
        $region104: #{tpu_custom_call.1} parent=92 // pred_region
          %p520 = scmp.lt.s32.totalorder %s25, 1
          %s521 = scalar_select %p520, %s25, 1
          %s522 = smul.addr %s521, 4
          %s523 = smul.addr %s522, 8
          %s524 = scalar_lea.vmem %s4, %s523
        $region105: #{tpu_custom_call.1} parent=92 // pred_fallthru
          _
      $region93: #{tpu_custom_call.1} parent=5 // pred_fallthru
        _
    $region6: #{tpu_custom_call.1} parent=1 // loop_footer
      %s18 = sadd.s32 1, %s14
    $region7: #{tpu_custom_call.1} parent=1 // loop_footer_branch
      %13 = sbr.rel target = $region3
    $region8: #{tpu_custom_call.1} parent=1 // loop_exit
      _
    %525 = vsyncpa [#allocation4], 1
    %s526 = scalar_lea.sflag [#allocation4], 1
    %527 = vsyncpa %s526, 1

</llo_original>
